<compile_context>
chip_gen: v7x
topology: tpu7x:2x2x1
jax: 0.10.0
libtpu: 0.0.40
codegen_flags: <defaults>
</compile_context>

<pallas_src>
import math

import jax
import jax.numpy as jnp
from jax.experimental import pallas as pl
from jax.experimental.pallas import tpu as pltpu


def _bins_encoding_kernel(x_ref, edges_ref, o_ref):
    # x_ref:     (TR, C) float32 -- C is a multiple of F; lane c holds feature c % F
    # edges_ref: (E, C)  float32 -- per-lane edge table (constant block -> resident)
    # o_ref:     (TR, C) int32 / int16
    x = x_ref[...]
    edges = edges_ref[...]
    n_edges = edges.shape[0]              # static & small -> unrolled Python loop
    # bucketize(v, edges, right=True) - 1 == (n_edges - 1) - #(v < edge)
    # (also gives n_edges - 1 for NaN, matching torch.bucketize).
    cnt = jnp.full(x.shape, n_edges - 1, jnp.int32)
    for e in range(n_edges):
        cnt = cnt - (x < edges[e:e + 1, :]).astype(jnp.int32)
    o_ref[...] = cnt.astype(o_ref.dtype)


def bins_encoding(x, edges, *, out_dtype=jnp.int32, block_elems=1 << 18):
    """x: (..., F) float; edges: (F, E) padded edge buffer (_BinsEncodingImpl.edges).

    Returns bin indices of shape (..., F) with dtype `out_dtype` (default int32;
    pass jnp.int16 to halve output HBM traffic if the consumer can cast).
    `block_elems` ~ elements per grid step per buffer (~1 MiB f32 by default).
    """
    orig_shape = x.shape
    F = int(orig_shape[-1])
    edges_f = jnp.asarray(edges, jnp.float32)
    assert edges_f.shape[0] == F
    E = int(edges_f.shape[1])

    # Row width C: a multiple of F (so lane c <-> feature c % F survives the
    # flat reshape).  For small F also a multiple of 128 (fully dense stores);
    # for large F, F itself is already lane-dense enough.
    if F >= 256:
        C = F
    else:
        C = F * (128 // math.gcd(F, 128))          # lcm(F, 128)
    spr = C // F                                    # samples packed per row

    xf = jnp.reshape(x, (-1,)).astype(jnp.float32)  # contiguous flatten: free
    N = int(xf.shape[0])

    # Pad the flat stream up to whole 8-row groups of width C.  When the batch
    # already divides evenly this is a no-op and the wrapper is copy-free.
    R = max(-(-N // (8 * C)), 1) * 8
    N_pad = R * C
    if N_pad != N:
        xf = jnp.pad(xf, (0, N_pad - N))
    xr = jnp.reshape(xf, (R, C))                    # contiguous reshape: free

    # Per-lane edge table: lane c holds the edges of feature c % F.  Tiny.
    edges_lane = jnp.tile(edges_f.T, (1, spr))      # (E, C)

    # Row tile: ~block_elems elements per grid step (multiple of 8 rows), but
    # keep >= 2 grid steps when there is enough work so v7x's two TensorCores
    # both get a share via dimension_semantics=("parallel",).
    TR = max(8, (block_elems // C) // 8 * 8)
    if R >= 16:
        TR = min(TR, ((R // 2) + 7) // 8 * 8)
    TR = min(TR, R)
    grid = (-(-R // TR),)

    out_itemsize = jnp.dtype(out_dtype).itemsize
    # 2 pipeline buffers per tiled operand + resident edge table + headroom for
    # in-kernel intermediates (x, cnt) and bookkeeping.
    vmem_bytes = (2 * TR * C * 4 + 2 * TR * C * out_itemsize
                  + 2 * E * C * 4 + 3 * TR * C * 4 + (4 << 20))
    vmem_bytes = max(vmem_bytes, 16 << 20)

    out = pl.pallas_call(
        _bins_encoding_kernel,
        out_shape=jax.ShapeDtypeStruct((R, C), out_dtype),
        grid_spec=pltpu.PrefetchScalarGridSpec(
            num_scalar_prefetch=0,
            grid=grid,
            in_specs=[
                pl.BlockSpec((TR, C), lambda i: (i, 0)),   # streaming x tile
                pl.BlockSpec((E, C), lambda i: (0, 0)),    # constant block -> fetched once
            ],
            out_specs=pl.BlockSpec((TR, C), lambda i: (i, 0)),
        ),
        compiler_params=pltpu.CompilerParams(
            dimension_semantics=("parallel",),
            vmem_limit_bytes=int(vmem_bytes),
        ),
    )(xr, edges_lane)

    # Free (pure metadata) when no padding was added; otherwise one small slice
    # copy of the (narrow-dtype) output.
    return jnp.reshape(jnp.reshape(out, (-1,))[:N], orig_shape)


if __name__ == "__main__":
    key = jax.random.PRNGKey(0)
    F = 6
    # per-feature number of bin edges (each >= 2), deterministic
    bin_edge_counts = [3, 5, 9, 4, 9, 7]
    max_n_edges = max(bin_edge_counts)

    keys = jax.random.split(key, F + 1)
    bins = [jnp.sort(jax.random.uniform(keys[i], (n,), minval=-2.0, maxval=2.0,
                                        dtype=jnp.float32))
            for i, n in enumerate(bin_edge_counts)]

    # Replicate _BinsEncodingImpl.__init__: pad each feature's edges with +inf
    # to max_n_edges, stack, drop the last column.  (The `mask` buffer of the
    # module is never used in forward().)
    padded = jnp.stack([
        jnp.concatenate([b, jnp.full((max_n_edges,), jnp.inf, jnp.float32)])[:max_n_edges]
        for b in bins
    ])                               # (F, max_n_edges)
    edges = padded[:, :-1]           # (F, max_n_edges - 1)

    # Input: (*, n_features) with arbitrary leading dims; include exact-edge
    # ties to exercise the right=True boundary rule.
    x = jax.random.normal(keys[F], (2, 32, F), jnp.float32) * 1.5
    x = x.at[0, 0, :].set(padded[:, 1])
    x = x.at[0, 1, :].set(padded[:, 0])

    out = bins_encoding(x, edges)
    jax.block_until_ready(out)

    # Pure-JAX reference of torch.bucketize(..., right=True) - 1
    xb = x.reshape(-1, F)
    ref = (jnp.sum(edges[None, :, :] <= xb[:, :, None], axis=-1).astype(jnp.int32)
           - 1).reshape(x.shape)

    assert out.shape == x.shape and out.dtype == jnp.int32
    assert bool(jnp.all(out == ref)), "mismatch vs reference (int32)"

    # Narrow-output variant (halves output HBM traffic; cast downstream if
    # int64/int32 semantics are required).
    out16 = bins_encoding(x, edges, out_dtype=jnp.int16)
    jax.block_until_ready(out16)
    assert out16.dtype == jnp.int16
    assert bool(jnp.all(out16.astype(jnp.int32) == ref)), "mismatch vs reference (int16)"

    print("KERNEL_OK")
</pallas_src>

<mosaic_0001>
module attributes {stable_mosaic.version = 11 : i64} {
  func.func @_bins_encoding_kernel(%arg0: i32, %arg1: memref<8x384xf32, #tpu.memory_space<vmem>>, %arg2: memref<8x384xf32, #tpu.memory_space<vmem>>, %arg3: memref<8x384xi32, #tpu.memory_space<vmem>>) attributes {dimension_semantics = [#tpu.dimension_semantics<parallel>], iteration_bounds = array<i64: 1>, scalar_prefetch = 0 : i64, scratch_operands = 0 : i64, tpu.core_type = #tpu.core_type<tc>, window_params = [{transform_indices = @transform_0, window_bounds = array<i64: 8, 384>}, {pipeline_mode = #tpu.pipeline_mode<synchronous>, transform_indices = @transform_1, window_bounds = array<i64: 8, 384>}, {transform_indices = @transform_2, window_bounds = array<i64: 8, 384>}]} {
    %c0 = arith.constant 0 : index
    %c0_0 = arith.constant 0 : index
    %0 = vector.load %arg1[%c0, %c0_0] : memref<8x384xf32, #tpu.memory_space<vmem>>, vector<8x384xf32>
    %c0_1 = arith.constant 0 : index
    %c0_2 = arith.constant 0 : index
    %1 = vector.load %arg2[%c0_1, %c0_2] : memref<8x384xf32, #tpu.memory_space<vmem>>, vector<8x384xf32>
    %c7_i32 = arith.constant 7 : i32
    %2 = vector.broadcast %c7_i32 : i32 to vector<8x384xi32>
    %3 = vector.extract_strided_slice %1 {offsets = [0, 0], sizes = [1, 384], strides = [1, 1]} : vector<8x384xf32> to vector<1x384xf32>
    %4 = vector.broadcast %3 : vector<1x384xf32> to vector<8x384xf32>
    %5 = arith.cmpf olt, %0, %4 : vector<8x384xf32>
    %6 = arith.extui %5 : vector<8x384xi1> to vector<8x384xi32>
    %7 = arith.subi %2, %6 : vector<8x384xi32>
    %8 = vector.extract_strided_slice %1 {offsets = [1, 0], sizes = [1, 384], strides = [1, 1]} : vector<8x384xf32> to vector<1x384xf32>
    %9 = vector.broadcast %8 : vector<1x384xf32> to vector<8x384xf32>
    %10 = arith.cmpf olt, %0, %9 : vector<8x384xf32>
    %11 = arith.extui %10 : vector<8x384xi1> to vector<8x384xi32>
    %12 = arith.subi %7, %11 : vector<8x384xi32>
    %13 = vector.extract_strided_slice %1 {offsets = [2, 0], sizes = [1, 384], strides = [1, 1]} : vector<8x384xf32> to vector<1x384xf32>
    %14 = vector.broadcast %13 : vector<1x384xf32> to vector<8x384xf32>
    %15 = arith.cmpf olt, %0, %14 : vector<8x384xf32>
    %16 = arith.extui %15 : vector<8x384xi1> to vector<8x384xi32>
    %17 = arith.subi %12, %16 : vector<8x384xi32>
    %18 = vector.extract_strided_slice %1 {offsets = [3, 0], sizes = [1, 384], strides = [1, 1]} : vector<8x384xf32> to vector<1x384xf32>
    %19 = vector.broadcast %18 : vector<1x384xf32> to vector<8x384xf32>
    %20 = arith.cmpf olt, %0, %19 : vector<8x384xf32>
    %21 = arith.extui %20 : vector<8x384xi1> to vector<8x384xi32>
    %22 = arith.subi %17, %21 : vector<8x384xi32>
    %23 = vector.extract_strided_slice %1 {offsets = [4, 0], sizes = [1, 384], strides = [1, 1]} : vector<8x384xf32> to vector<1x384xf32>
    %24 = vector.broadcast %23 : vector<1x384xf32> to vector<8x384xf32>
    %25 = arith.cmpf olt, %0, %24 : vector<8x384xf32>
    %26 = arith.extui %25 : vector<8x384xi1> to vector<8x384xi32>
    %27 = arith.subi %22, %26 : vector<8x384xi32>
    %28 = vector.extract_strided_slice %1 {offsets = [5, 0], sizes = [1, 384], strides = [1, 1]} : vector<8x384xf32> to vector<1x384xf32>
    %29 = vector.broadcast %28 : vector<1x384xf32> to vector<8x384xf32>
    %30 = arith.cmpf olt, %0, %29 : vector<8x384xf32>
    %31 = arith.extui %30 : vector<8x384xi1> to vector<8x384xi32>
    %32 = arith.subi %27, %31 : vector<8x384xi32>
    %33 = vector.extract_strided_slice %1 {offsets = [6, 0], sizes = [1, 384], strides = [1, 1]} : vector<8x384xf32> to vector<1x384xf32>
    %34 = vector.broadcast %33 : vector<1x384xf32> to vector<8x384xf32>
    %35 = arith.cmpf olt, %0, %34 : vector<8x384xf32>
    %36 = arith.extui %35 : vector<8x384xi1> to vector<8x384xi32>
    %37 = arith.subi %32, %36 : vector<8x384xi32>
    %38 = vector.extract_strided_slice %1 {offsets = [7, 0], sizes = [1, 384], strides = [1, 1]} : vector<8x384xf32> to vector<1x384xf32>
    %39 = vector.broadcast %38 : vector<1x384xf32> to vector<8x384xf32>
    %40 = arith.cmpf olt, %0, %39 : vector<8x384xf32>
    %41 = arith.extui %40 : vector<8x384xi1> to vector<8x384xi32>
    %42 = arith.subi %37, %41 : vector<8x384xi32>
    %c0_3 = arith.constant 0 : index
    %c0_4 = arith.constant 0 : index
    %43 = vector.load %arg3[%c0_3, %c0_4] : memref<8x384xi32, #tpu.memory_space<vmem>>, vector<8x384xi32>
    tpu.vector_store %arg3[%c0_3, %c0_4], %42 {strides = array<i32>} : memref<8x384xi32, #tpu.memory_space<vmem>>, vector<8x384xi32>,
    return
  }
  func.func @transform_0(%arg0: i32) -> (i32, i32) {
    %c0_i32 = arith.constant 0 : i32
    %c0_i32_0 = arith.constant 0 : i32
    return %arg0, %c0_i32 : i32, i32
  }
  func.func @transform_1(%arg0: i32) -> (i32, i32) {
    %c0_i32 = arith.constant 0 : i32
    %c0_i32_0 = arith.constant 0 : i32
    %c0_i32_1 = arith.constant 0 : i32
    return %c0_i32, %c0_i32_0 : i32, i32
  }
  func.func @transform_2(%arg0: i32) -> (i32, i32) {
    %c0_i32 = arith.constant 0 : i32
    %c0_i32_0 = arith.constant 0 : i32
    return %arg0, %c0_i32 : i32, i32
  }
}

</mosaic_0001>

<llo_original>
// kernel: tpu_custom_call.1
$region0: #{tpu_custom_call.1}
  #allocation0 [shape = 'u32[]', space=smem, size = 0x4, offset = 0x4, fixed_abs, tag = 'smem constant byte address 0x4 - core index']
  #allocation1 [shape = 'u32[144,128]{1,0:T(1,128)}', space=vmem, size = 0x12000, scoped, tag = 'internal scratch']
  %s0 = inlined_call_operand.hbm [shape: f32[8,384], index: 0, kind: input, shape index: {}]
  %s1 = inlined_call_operand.hbm [shape: f32[8,384], index: 1, kind: input, shape index: {}]
  %s2 = inlined_call_operand.hbm [shape: s32[8,384], index: 2, kind: output, shape index: {}]
  %s3 = sld [smem:[#allocation0]]
  $region26: #{tpu_custom_call.1} parent=0
    _
  %s5 = ssub.s32 1, %s3
  %s6 = scalar_select 0, %s5, %s3
  $region1: #{tpu_custom_call.1} parent=0
    #allocation2 [shape = 'u8[12288]{0}', space=vmem, size = 0x3000, scoped, tag = 'input window, operand 0, single buffered']
    #allocation3 [shape = 's32[1]{0}', space=sflag, size = 0x4, scoped, tag = 'scoped memory for tpu_custom_call.1']
    #allocation4 [shape = 's32[1]{0}', space=sflag, size = 0x4, scoped, tag = 'scoped memory for tpu_custom_call.1']
    #allocation5 [shape = 'u8[12288]{0}', space=vmem, size = 0x3000, scoped, tag = 'input window, operand 1, single buffered']
    #allocation6 [shape = 's32[1]{0}', space=sflag, size = 0x4, scoped, tag = 'scoped memory for tpu_custom_call.1']
    #allocation7 [shape = 'u8[12288]{0}', space=vmem, size = 0x3000, scoped, tag = 'output window, operand 0, single buffered']
    %7 = vsyncpa [#allocation3], 0
    %8 = vsyncpa [#allocation6], 0
    %9 = vsyncpa [#allocation4], 0
    // Predicated region
    $region2: #{tpu_custom_call.1} parent=1 // pred_check
      _
    $region3: #{tpu_custom_call.1} parent=1 // pred_check_branch
      %11 = sbr.rel (0) target = $region5
    $region4: #{tpu_custom_call.1} parent=1 // pred_region
      %s13 = ssub.s32 384, 384
      %14 = vsyncadd [#allocation3], %s13
      %s16 = sshll.u32 [#allocation2], 4
      %s17 = int_to_ptr.vmem [resolvable:$true] %s16
      %19 = dma.hbm_to_vmem [thread:$0]  %s0, 384, %s17, [#allocation3]
    $region5: #{tpu_custom_call.1} parent=1 // pred_fallthru
      _
    // Predicated region
    $region6: #{tpu_custom_call.1} parent=1 // pred_check
      _
    $region7: #{tpu_custom_call.1} parent=1 // pred_check_branch
      %21 = sbr.rel (0) target = $region9
    $region8: #{tpu_custom_call.1} parent=1 // pred_region
      %s23 = ssub.s32 384, 384
      %24 = vsyncadd [#allocation6], %s23
      %s26 = sshll.u32 [#allocation5], 4
      %s27 = int_to_ptr.vmem [resolvable:$true] %s26
      %29 = dma.hbm_to_vmem [thread:$0]  %s1, 384, %s27, [#allocation6]
    $region9: #{tpu_custom_call.1} parent=1 // pred_fallthru
      _
    // Predicated region
    $region10: #{tpu_custom_call.1} parent=1 // pred_check
      _
    $region11: #{tpu_custom_call.1} parent=1 // pred_check_branch
      %31 = sbr.rel (0) target = $region13
    $region12: #{tpu_custom_call.1} parent=1 // pred_region
      %32 = dma.done [#allocation3], 384
    $region13: #{tpu_custom_call.1} parent=1 // pred_fallthru
      _
    // Predicated region
    $region14: #{tpu_custom_call.1} parent=1 // pred_check
      _
    $region15: #{tpu_custom_call.1} parent=1 // pred_check_branch
      %34 = sbr.rel (0) target = $region17
    $region16: #{tpu_custom_call.1} parent=1 // pred_region
      %35 = dma.done [#allocation6], 384
    $region17: #{tpu_custom_call.1} parent=1 // pred_fallthru
      _
    %v36 = vld [vmem:[#allocation2] sm:$0xff]
    %v37 = vld [vmem:[#allocation2 + $0x8] sm:$0xff]
    %v38 = vld [vmem:[#allocation2 + $0x10] sm:$0xff]
    %v39 = vld [vmem:[#allocation5] sm:$0xff]
    %v40 = vld [vmem:[#allocation5 + $0x8] sm:$0xff]
    %v41 = vld [vmem:[#allocation5 + $0x10] sm:$0xff]
    %v42 = vlaneseq
    %v43 = vshrl.u32 %v42, 7
    %v44 = vsub.s32 0, %v43
    %v45 = vrot.slane %v39, %v44
    %v46 = vlaneseq
    %v47 = vshrl.u32 %v46, 7
    %v48 = vsub.s32 0, %v47
    %v49 = vrot.slane %v40, %v48
    %v50 = vlaneseq
    %v51 = vshrl.u32 %v50, 7
    %v52 = vsub.s32 0, %v51
    %v53 = vrot.slane %v41, %v52
    %vm54 = vcmp.lt.f32.partialorder %v36, %v45
    %vm55 = vcmp.lt.f32.partialorder %v37, %v49
    %vm56 = vcmp.lt.f32.partialorder %v38, %v53
    %v57 = vsel %vm54, 1, 0
    %v58 = vsel %vm55, 1, 0
    %v59 = vsel %vm56, 1, 0
    %v60 = vsub.s32 7, %v57
    %v61 = vsub.s32 7, %v58
    %v62 = vsub.s32 7, %v59
    %v63 = vlaneseq
    %v64 = vshrl.u32 %v63, 7
    %v65 = vsub.s32 1, %v64
    %v66 = vrot.slane %v39, %v65
    %v67 = vlaneseq
    %v68 = vshrl.u32 %v67, 7
    %v69 = vsub.s32 1, %v68
    %v70 = vrot.slane %v40, %v69
    %v71 = vlaneseq
    %v72 = vshrl.u32 %v71, 7
    %v73 = vsub.s32 1, %v72
    %v74 = vrot.slane %v41, %v73
    %vm75 = vcmp.lt.f32.partialorder %v36, %v66
    %vm76 = vcmp.lt.f32.partialorder %v37, %v70
    %vm77 = vcmp.lt.f32.partialorder %v38, %v74
    %v78 = vsel %vm75, 1, 0
    %v79 = vsel %vm76, 1, 0
    %v80 = vsel %vm77, 1, 0
    %v81 = vsub.s32 %v60, %v78
    %v82 = vsub.s32 %v61, %v79
    %v83 = vsub.s32 %v62, %v80
    %v84 = vlaneseq
    %v85 = vshrl.u32 %v84, 7
    %v86 = vsub.s32 2, %v85
    %v87 = vrot.slane %v39, %v86
    %v88 = vlaneseq
    %v89 = vshrl.u32 %v88, 7
    %v90 = vsub.s32 2, %v89
    %v91 = vrot.slane %v40, %v90
    %v92 = vlaneseq
    %v93 = vshrl.u32 %v92, 7
    %v94 = vsub.s32 2, %v93
    %v95 = vrot.slane %v41, %v94
    %vm96 = vcmp.lt.f32.partialorder %v36, %v87
    %vm97 = vcmp.lt.f32.partialorder %v37, %v91
    %vm98 = vcmp.lt.f32.partialorder %v38, %v95
    %v99 = vsel %vm96, 1, 0
    %v100 = vsel %vm97, 1, 0
    %v101 = vsel %vm98, 1, 0
    %v102 = vsub.s32 %v81, %v99
    %v103 = vsub.s32 %v82, %v100
    %v104 = vsub.s32 %v83, %v101
    %v105 = vlaneseq
    %v106 = vshrl.u32 %v105, 7
    %v107 = vsub.s32 3, %v106
    %v108 = vrot.slane %v39, %v107
    %v109 = vlaneseq
    %v110 = vshrl.u32 %v109, 7
    %v111 = vsub.s32 3, %v110
    %v112 = vrot.slane %v40, %v111
    %v113 = vlaneseq
    %v114 = vshrl.u32 %v113, 7
    %v115 = vsub.s32 3, %v114
    %v116 = vrot.slane %v41, %v115
    %vm117 = vcmp.lt.f32.partialorder %v36, %v108
    %vm118 = vcmp.lt.f32.partialorder %v37, %v112
    %vm119 = vcmp.lt.f32.partialorder %v38, %v116
    %v120 = vsel %vm117, 1, 0
    %v121 = vsel %vm118, 1, 0
    %v122 = vsel %vm119, 1, 0
    %v123 = vsub.s32 %v102, %v120
    %v124 = vsub.s32 %v103, %v121
    %v125 = vsub.s32 %v104, %v122
    %v126 = vlaneseq
    %v127 = vshrl.u32 %v126, 7
    %v128 = vsub.s32 4, %v127
    %v129 = vrot.slane %v39, %v128
    %v130 = vlaneseq
    %v131 = vshrl.u32 %v130, 7
    %v132 = vsub.s32 4, %v131
    %v133 = vrot.slane %v40, %v132
    %v134 = vlaneseq
    %v135 = vshrl.u32 %v134, 7
    %v136 = vsub.s32 4, %v135
    %v137 = vrot.slane %v41, %v136
    %vm138 = vcmp.lt.f32.partialorder %v36, %v129
    %vm139 = vcmp.lt.f32.partialorder %v37, %v133
    %vm140 = vcmp.lt.f32.partialorder %v38, %v137
    %v141 = vsel %vm138, 1, 0
    %v142 = vsel %vm139, 1, 0
    %v143 = vsel %vm140, 1, 0
    %v144 = vsub.s32 %v123, %v141
    %v145 = vsub.s32 %v124, %v142
    %v146 = vsub.s32 %v125, %v143
    %v147 = vlaneseq
    %v148 = vshrl.u32 %v147, 7
    %v149 = vsub.s32 5, %v148
    %v150 = vrot.slane %v39, %v149
    %v151 = vlaneseq
    %v152 = vshrl.u32 %v151, 7
    %v153 = vsub.s32 5, %v152
    %v154 = vrot.slane %v40, %v153
    %v155 = vlaneseq
    %v156 = vshrl.u32 %v155, 7
    %v157 = vsub.s32 5, %v156
    %v158 = vrot.slane %v41, %v157
    %vm159 = vcmp.lt.f32.partialorder %v36, %v150
    %vm160 = vcmp.lt.f32.partialorder %v37, %v154
    %vm161 = vcmp.lt.f32.partialorder %v38, %v158
    %v162 = vsel %vm159, 1, 0
    %v163 = vsel %vm160, 1, 0
    %v164 = vsel %vm161, 1, 0
    %v165 = vsub.s32 %v144, %v162
    %v166 = vsub.s32 %v145, %v163
    %v167 = vsub.s32 %v146, %v164
    %v168 = vlaneseq
    %v169 = vshrl.u32 %v168, 7
    %v170 = vsub.s32 6, %v169
    %v171 = vrot.slane %v39, %v170
    %v172 = vlaneseq
    %v173 = vshrl.u32 %v172, 7
    %v174 = vsub.s32 6, %v173
    %v175 = vrot.slane %v40, %v174
    %v176 = vlaneseq
    %v177 = vshrl.u32 %v176, 7
    %v178 = vsub.s32 6, %v177
    %v179 = vrot.slane %v41, %v178
    %vm180 = vcmp.lt.f32.partialorder %v36, %v171
    %vm181 = vcmp.lt.f32.partialorder %v37, %v175
    %vm182 = vcmp.lt.f32.partialorder %v38, %v179
    %v183 = vsel %vm180, 1, 0
    %v184 = vsel %vm181, 1, 0
    %v185 = vsel %vm182, 1, 0
    %v186 = vsub.s32 %v165, %v183
    %v187 = vsub.s32 %v166, %v184
    %v188 = vsub.s32 %v167, %v185
    %v189 = vlaneseq
    %v190 = vshrl.u32 %v189, 7
    %v191 = vsub.s32 7, %v190
    %v192 = vrot.slane %v39, %v191
    %v193 = vlaneseq
    %v194 = vshrl.u32 %v193, 7
    %v195 = vsub.s32 7, %v194
    %v196 = vrot.slane %v40, %v195
    %v197 = vlaneseq
    %v198 = vshrl.u32 %v197, 7
    %v199 = vsub.s32 7, %v198
    %v200 = vrot.slane %v41, %v199
    %vm201 = vcmp.lt.f32.partialorder %v36, %v192
    %vm202 = vcmp.lt.f32.partialorder %v37, %v196
    %vm203 = vcmp.lt.f32.partialorder %v38, %v200
    %v204 = vsel %vm201, 1, 0
    %v205 = vsel %vm202, 1, 0
    %v206 = vsel %vm203, 1, 0
    %v207 = vsub.s32 %v186, %v204
    %v208 = vsub.s32 %v187, %v205
    %v209 = vsub.s32 %v188, %v206
    %210 = vst [vmem:[#allocation7] sm:$0xff] %v207
    %211 = vst [vmem:[#allocation7 + $0x8] sm:$0xff] %v208
    %212 = vst [vmem:[#allocation7 + $0x10] sm:$0xff] %v209
    // Predicated region
    $region18: #{tpu_custom_call.1} parent=1 // pred_check
      _
    $region19: #{tpu_custom_call.1} parent=1 // pred_check_branch
      %214 = sbr.rel (0) target = $region21
    $region20: #{tpu_custom_call.1} parent=1 // pred_region
      %s216 = ssub.s32 384, 384
      %217 = vsyncadd [#allocation4], %s216
      %s219 = sshll.u32 [#allocation7], 4
      %s220 = int_to_ptr.vmem [resolvable:$true] %s219
      %222 = dma.vmem_to_hbm [thread:$0]  %s220, 384, %s2, [#allocation4]
    $region21: #{tpu_custom_call.1} parent=1 // pred_fallthru
      _
    // Predicated region
    $region22: #{tpu_custom_call.1} parent=1 // pred_check
      _
    $region23: #{tpu_custom_call.1} parent=1 // pred_check_branch
      %224 = sbr.rel (0) target = $region25
    $region24: #{tpu_custom_call.1} parent=1 // pred_region
      %225 = dma.done [#allocation4], 384
    $region25: #{tpu_custom_call.1} parent=1 // pred_fallthru
      _
    %226 = vsyncpa [#allocation3], 1
    %227 = vsyncpa [#allocation6], 1
    %228 = vsyncpa [#allocation4], 1

</llo_original>
